<compile_context>
chip_gen: v6e
topology: v6e:2x2x1
jax: 0.10.0
libtpu: 0.0.40
codegen_flags: <defaults>
</compile_context>

<pallas_src>
import functools

import jax
import jax.numpy as jnp
from jax.experimental import pallas as pl
from jax.experimental.pallas import tpu as pltpu


# --------------------------------------------------------------------------
# Kernels
# --------------------------------------------------------------------------
def _stats_kernel(x_ref, sum_ref, sq_ref, *, mxu_reduce):
    """Accumulate per-channel sum / sum-of-squares.

    Grid is (N, hw_tiles): axis 0 is parallel (per-N partial outputs, so the
    reduction is shared across v7x's two TensorCores); axis 1 is the serial
    reduction axis across which the (C, 1) output blocks stay resident.
    """
    @pl.when(pl.program_id(1) == 0)
    def _():
        sum_ref[...] = jnp.zeros_like(sum_ref)
        sq_ref[...] = jnp.zeros_like(sq_ref)

    x = x_ref[...]                                            # (C, tile)
    if mxu_reduce:
        # bf16: lane reduction on the idle MXU with exact f32 accumulation;
        # the only VPU work left per element is the bf16 square.
        ones = jnp.ones((x.shape[1], 1), dtype=x.dtype)
        sum_ref[...] += jnp.dot(x, ones, preferred_element_type=jnp.float32)
        sq_ref[...] += jnp.dot(x * x, ones, preferred_element_type=jnp.float32)
    else:
        # f32 path is HBM-bound everywhere; plain VPU/XLU reduce is fine.
        xf = x.astype(jnp.float32)
        sum_ref[...] += jnp.sum(xf, axis=1, keepdims=True)
        sq_ref[...] += jnp.sum(xf * xf, axis=1, keepdims=True)


def _apply_kernel(scale_ref, shift_ref, x_ref, o_ref):
    """y = x * scale[c] + shift[c]; math runs in scale's dtype
    (f32, or bf16 for bf16 inputs -> 2 VPU ops/element)."""
    x = x_ref[...].astype(scale_ref.dtype)                    # no-op when equal
    o_ref[...] = (x * scale_ref[...] + shift_ref[...]).astype(o_ref.dtype)


# --------------------------------------------------------------------------
# Tiling / VMEM budget helpers
# --------------------------------------------------------------------------
def _vmem_budget_bytes():
    """(vmem_limit_bytes, live_set_budget_bytes) for the current generation."""
    cap = None
    try:
        cap = getattr(pltpu.get_tpu_info(), "vmem_capacity_bytes", None)
    except Exception:
        cap = None
    if not cap:
        cap = 64 * 1024 * 1024          # conservative default (v7x per-core VMEM)
    # v7x (64 MiB): ~48 MiB limit; v5e/v6e (128 MiB): 96 MiB limit.
    vmem_limit = int(min(cap * 3 // 4, 96 * 1024 * 1024))
    live_budget = int(vmem_limit * 0.85)   # headroom for compiler scratch / temps
    return vmem_limit, live_budget


def _pick_tile(hw, c, itemsize, live_budget):
    """Pick a lane tile (multiple of 128) and tile count.

    Sized so that ~6 blocks of shape (C, tile) (double-buffered input + output
    blocks plus in-kernel temporaries) fit the live-set budget, and so that
    tile * n_tiles covers hw with minimal padding.
    """
    cols = -(-hw // 128)                                       # 128-lane columns
    max_cols = max(1, live_budget // (6 * c * itemsize * 128))
    n_tiles = -(-cols // max_cols)
    tile_cols = -(-cols // n_tiles)
    return tile_cols * 128, n_tiles


# --------------------------------------------------------------------------
# Wrapper
# --------------------------------------------------------------------------
def bayesian_batch_norm(x_nchw, running_mean, running_var, weight, bias,
                        *, prior, eps=1e-5):
    """x_nchw: (N, C, H, W). Returns (N, C, H, W) in the input dtype."""
    N, C, H, W = x_nchw.shape
    HW = H * W
    M = N * HW

    itemsize = max(jnp.dtype(x_nchw.dtype).itemsize, 4)       # budget as if f32
    vmem_limit, live_budget = _vmem_budget_bytes()
    tile, n_tiles = _pick_tile(HW, C, itemsize, live_budget)
    hw_pad = tile * n_tiles

    x3d = x_nchw.reshape(N, C, HW)                             # pure reshape
    if hw_pad != HW:
        # Zero padding contributes 0 to sum and sum-of-squares; mean/var use
        # the true count M, so statistics are unaffected.
        x3d = jnp.pad(x3d, ((0, 0), (0, 0), (0, hw_pad - HW)))

    use_mxu = x_nchw.dtype == jnp.bfloat16

    # ---- Pass 1: per-channel sum / sum-of-squares (single read of x). ----
    s_part, sq_part = pl.pallas_call(
        functools.partial(_stats_kernel, mxu_reduce=use_mxu),
        out_shape=(jax.ShapeDtypeStruct((N, C, 1), jnp.float32),
                   jax.ShapeDtypeStruct((N, C, 1), jnp.float32)),
        grid=(N, n_tiles),
        in_specs=[pl.BlockSpec((None, C, tile), lambda n, t: (n, 0, t))],
        out_specs=(pl.BlockSpec((None, C, 1), lambda n, t: (n, 0, 0)),
                   pl.BlockSpec((None, C, 1), lambda n, t: (n, 0, 0))),
        compiler_params=pltpu.CompilerParams(
            dimension_semantics=("parallel", "arbitrary"),
            vmem_limit_bytes=vmem_limit),
    )(x3d)

    s = jnp.sum(s_part, axis=0)                                # (C, 1)
    sq = jnp.sum(sq_part, axis=0)                              # (C, 1)

    # ---- Tiny per-channel math, computed once (not per tile). ----
    m = float(M)
    denom = float(max(M - 1, 1))
    rm = running_mean.astype(jnp.float32).reshape(C, 1)
    rv = running_var.astype(jnp.float32).reshape(C, 1)
    w = weight.astype(jnp.float32).reshape(C, 1)
    b = bias.astype(jnp.float32).reshape(C, 1)

    batch_mean = s * (1.0 / m)
    # Unbiased variance from sum / sumsq; clamp against catastrophic cancellation.
    batch_var = jnp.maximum((sq - m * batch_mean * batch_mean) * (1.0 / denom), 0.0)

    comb_mean = prior * rm + (1.0 - prior) * batch_mean
    comb_var = prior * rv + (1.0 - prior) * batch_var
    inv_std = jax.lax.rsqrt(comb_var + eps)
    scale = inv_std * w                                        # (C, 1)
    shift = b - comb_mean * scale                              # (C, 1)

    compute_dtype = jnp.bfloat16 if use_mxu else jnp.float32
    scale_c = scale.astype(compute_dtype)
    shift_c = shift.astype(compute_dtype)

    # ---- Pass 2: fully parallel per-element affine. ----
    out3d = pl.pallas_call(
        _apply_kernel,
        out_shape=jax.ShapeDtypeStruct((N, C, hw_pad), x_nchw.dtype),
        grid=(N, n_tiles),
        in_specs=[pl.BlockSpec((C, 1), lambda n, t: (0, 0)),
                  pl.BlockSpec((C, 1), lambda n, t: (0, 0)),
                  pl.BlockSpec((None, C, tile), lambda n, t: (n, 0, t))],
        out_specs=pl.BlockSpec((None, C, tile), lambda n, t: (n, 0, t)),
        compiler_params=pltpu.CompilerParams(
            dimension_semantics=("parallel", "parallel"),
            vmem_limit_bytes=vmem_limit),
    )(scale_c, shift_c, x3d)

    if hw_pad != HW:
        out3d = out3d[:, :, :HW]
    return out3d.reshape(N, C, H, W)


# --------------------------------------------------------------------------
# Reference + test
# --------------------------------------------------------------------------
def _reference(x, rm, rv, w, b, prior, eps=1e-5):
    # Pure-JAX reference mirroring the PyTorch forward.
    batch_mean = jnp.mean(x, axis=(0, 2, 3))
    m = x.shape[0] * x.shape[2] * x.shape[3]
    diff = x - batch_mean[None, :, None, None]
    batch_var = jnp.sum(diff * diff, axis=(0, 2, 3)) / (m - 1)
    cm = prior * rm + (1 - prior) * batch_mean
    cv = prior * rv + (1 - prior) * batch_var
    return ((x - cm[None, :, None, None]) / jnp.sqrt(cv + eps)[None, :, None, None]
            * w[None, :, None, None] + b[None, :, None, None])


if __name__ == "__main__":
    key = jax.random.PRNGKey(0)
    k_x, k_rm, k_rv, k_w, k_b = jax.random.split(key, 5)

    N, C, H, W = 2, 4, 16, 16
    prior = 0.7
    eps = 1e-5

    x = jax.random.normal(k_x, (N, C, H, W), dtype=jnp.float32)
    running_mean = 0.1 * jax.random.normal(k_rm, (C,), dtype=jnp.float32)
    running_var = 1.0 + 0.1 * jax.random.uniform(k_rv, (C,), dtype=jnp.float32)
    weight = 1.0 + 0.1 * jax.random.normal(k_w, (C,), dtype=jnp.float32)
    bias = 0.1 * jax.random.normal(k_b, (C,), dtype=jnp.float32)

    # f32 path.
    out = bayesian_batch_norm(x, running_mean, running_var, weight, bias,
                              prior=prior, eps=eps)
    out = jax.block_until_ready(out)
    ref = _reference(x, running_mean, running_var, weight, bias, prior, eps)
    assert out.shape == (N, C, H, W)
    assert jnp.allclose(out, ref, atol=5e-5, rtol=5e-5)

    # bf16 path (MXU-based stats reduction + bf16 apply math).
    x_bf16 = x.astype(jnp.bfloat16)
    out_bf16 = bayesian_batch_norm(x_bf16, running_mean, running_var, weight,
                                   bias, prior=prior, eps=eps)
    out_bf16 = jax.block_until_ready(out_bf16)
    ref_bf16 = _reference(x_bf16.astype(jnp.float32), running_mean, running_var,
                          weight, bias, prior, eps)
    assert out_bf16.dtype == jnp.bfloat16
    assert jnp.allclose(out_bf16.astype(jnp.float32), ref_bf16,
                        atol=1e-1, rtol=1e-1)

    print("KERNEL_OK")
</pallas_src>

<mosaic_0001>
module attributes {stable_mosaic.version = 11 : i64} {
  func.func @_stats_kernel(%arg0: i32, %arg1: i32, %arg2: memref<1x4x256xf32, #tpu.memory_space<vmem>>, %arg3: memref<1x4x1xf32, #tpu.memory_space<vmem>>, %arg4: memref<1x4x1xf32, #tpu.memory_space<vmem>>) attributes {dimension_semantics = [#tpu.dimension_semantics<parallel>, #tpu.dimension_semantics<arbitrary>], iteration_bounds = array<i64: 2, 1>, scalar_prefetch = 0 : i64, scratch_operands = 0 : i64, tpu.core_type = #tpu.core_type<tc>, window_params = [{transform_indices = @transform_0, window_bounds = array<i64: 1, 4, 256>}, {transform_indices = @transform_1, window_bounds = array<i64: 1, 4, 1>}, {transform_indices = @transform_2, window_bounds = array<i64: 1, 4, 1>}]} {
    %c0_i32 = arith.constant 0 : i32
    %0 = arith.cmpi eq, %arg1, %c0_i32 : i32
    %1 = arith.extui %0 : i1 to i32
    %c0_i32_0 = arith.constant 0 : i32
    %2 = arith.cmpi ne, %1, %c0_i32_0 : i32
    scf.if %2 {
      %cst_16 = arith.constant 0.000000e+00 : f32
      %22 = vector.broadcast %cst_16 : f32 to vector<4x1xf32>
      %c0_17 = arith.constant 0 : index
      %c0_18 = arith.constant 0 : index
      %c0_19 = arith.constant 0 : index
      %23 = vector.load %arg3[%c0_17, %c0_18, %c0_19] : memref<1x4x1xf32, #tpu.memory_space<vmem>>, vector<1x4x1xf32>
      %24 = vector.shape_cast %23 : vector<1x4x1xf32> to vector<4x1xf32>
      %25 = vector.shape_cast %22 : vector<4x1xf32> to vector<1x4x1xf32>
      tpu.vector_store %arg3[%c0_17, %c0_18, %c0_19], %25 {strides = array<i32>} : memref<1x4x1xf32, #tpu.memory_space<vmem>>, vector<1x4x1xf32>,
      %cst_20 = arith.constant 0.000000e+00 : f32
      %26 = vector.broadcast %cst_20 : f32 to vector<4x1xf32>
      %c0_21 = arith.constant 0 : index
      %c0_22 = arith.constant 0 : index
      %c0_23 = arith.constant 0 : index
      %27 = vector.load %arg4[%c0_21, %c0_22, %c0_23] : memref<1x4x1xf32, #tpu.memory_space<vmem>>, vector<1x4x1xf32>
      %28 = vector.shape_cast %27 : vector<1x4x1xf32> to vector<4x1xf32>
      %29 = vector.shape_cast %26 : vector<4x1xf32> to vector<1x4x1xf32>
      tpu.vector_store %arg4[%c0_21, %c0_22, %c0_23], %29 {strides = array<i32>} : memref<1x4x1xf32, #tpu.memory_space<vmem>>, vector<1x4x1xf32>,
    } else {
    }
    %c0 = arith.constant 0 : index
    %c0_1 = arith.constant 0 : index
    %c0_2 = arith.constant 0 : index
    %3 = vector.load %arg2[%c0, %c0_1, %c0_2] : memref<1x4x256xf32, #tpu.memory_space<vmem>>, vector<1x4x256xf32>
    %4 = vector.shape_cast %3 : vector<1x4x256xf32> to vector<4x256xf32>
    %c0_3 = arith.constant 0 : index
    %c0_4 = arith.constant 0 : index
    %c0_5 = arith.constant 0 : index
    %5 = vector.load %arg3[%c0_3, %c0_4, %c0_5] : memref<1x4x1xf32, #tpu.memory_space<vmem>>, vector<1x4x1xf32>
    %6 = vector.shape_cast %5 : vector<1x4x1xf32> to vector<4x1xf32>
    %cst = arith.constant dense<0.000000e+00> : vector<4xf32>
    %7 = vector.multi_reduction <add>, %4, %cst [1] : vector<4x256xf32> to vector<4xf32>
    %8 = vector.shape_cast %7 : vector<4xf32> to vector<4x1xf32>
    %9 = arith.addf %6, %8 : vector<4x1xf32>
    %c0_6 = arith.constant 0 : index
    %c0_7 = arith.constant 0 : index
    %c0_8 = arith.constant 0 : index
    %10 = vector.load %arg3[%c0_6, %c0_7, %c0_8] : memref<1x4x1xf32, #tpu.memory_space<vmem>>, vector<1x4x1xf32>
    %11 = vector.shape_cast %10 : vector<1x4x1xf32> to vector<4x1xf32>
    %12 = vector.shape_cast %9 : vector<4x1xf32> to vector<1x4x1xf32>
    tpu.vector_store %arg3[%c0_6, %c0_7, %c0_8], %12 {strides = array<i32>} : memref<1x4x1xf32, #tpu.memory_space<vmem>>, vector<1x4x1xf32>,
    %c0_9 = arith.constant 0 : index
    %c0_10 = arith.constant 0 : index
    %c0_11 = arith.constant 0 : index
    %13 = vector.load %arg4[%c0_9, %c0_10, %c0_11] : memref<1x4x1xf32, #tpu.memory_space<vmem>>, vector<1x4x1xf32>
    %14 = vector.shape_cast %13 : vector<1x4x1xf32> to vector<4x1xf32>
    %15 = arith.mulf %4, %4 : vector<4x256xf32>
    %cst_12 = arith.constant dense<0.000000e+00> : vector<4xf32>
    %16 = vector.multi_reduction <add>, %15, %cst_12 [1] : vector<4x256xf32> to vector<4xf32>
    %17 = vector.shape_cast %16 : vector<4xf32> to vector<4x1xf32>
    %18 = arith.addf %14, %17 : vector<4x1xf32>
    %c0_13 = arith.constant 0 : index
    %c0_14 = arith.constant 0 : index
    %c0_15 = arith.constant 0 : index
    %19 = vector.load %arg4[%c0_13, %c0_14, %c0_15] : memref<1x4x1xf32, #tpu.memory_space<vmem>>, vector<1x4x1xf32>
    %20 = vector.shape_cast %19 : vector<1x4x1xf32> to vector<4x1xf32>
    %21 = vector.shape_cast %18 : vector<4x1xf32> to vector<1x4x1xf32>
    tpu.vector_store %arg4[%c0_13, %c0_14, %c0_15], %21 {strides = array<i32>} : memref<1x4x1xf32, #tpu.memory_space<vmem>>, vector<1x4x1xf32>,
    return
  }
  func.func @transform_0(%arg0: i32, %arg1: i32) -> (i32, i32, i32) {
    %c0_i32 = arith.constant 0 : i32
    %c0_i32_0 = arith.constant 0 : i32
    return %arg0, %c0_i32, %arg1 : i32, i32, i32
  }
  func.func @transform_1(%arg0: i32, %arg1: i32) -> (i32, i32, i32) {
    %c0_i32 = arith.constant 0 : i32
    %c0_i32_0 = arith.constant 0 : i32
    %c0_i32_1 = arith.constant 0 : i32
    return %arg0, %c0_i32, %c0_i32_0 : i32, i32, i32
  }
  func.func @transform_2(%arg0: i32, %arg1: i32) -> (i32, i32, i32) {
    %c0_i32 = arith.constant 0 : i32
    %c0_i32_0 = arith.constant 0 : i32
    %c0_i32_1 = arith.constant 0 : i32
    return %arg0, %c0_i32, %c0_i32_0 : i32, i32, i32
  }
}

</mosaic_0001>

<llo_original>
// kernel: tpu_custom_call.1
$region0: #{tpu_custom_call.1}
  #allocation0 [shape = 'u32[]', space=smem, size = 0x4, offset = 0x4, fixed_abs, tag = 'smem constant byte address 0x4 - core index']
  #allocation1 [shape = 'u32[144,128]{1,0:T(1,128)}', space=vmem, size = 0x12000, scoped, tag = 'internal scratch']
  %s0 = inlined_call_operand.hbm [shape: f32[2,4,256], index: 0, kind: input, shape index: {}]
  %s1 = inlined_call_operand.vmem [shape: f32[2,4,1], index: 1, kind: output, shape index: {0}]
  %s2 = inlined_call_operand.vmem [shape: f32[2,4,1], index: 2, kind: output, shape index: {1}]
  %3 = xla_tuple %s1, %s2
  %s4 = sld [smem:[#allocation0]]
  $region53: #{tpu_custom_call.1} parent=0
    _
  %s6 = ssub.s32 1, %s4
  %s7 = scalar_select 0, %s6, %s4
  $region1: #{tpu_custom_call.1} parent=0
    #allocation2 [shape = 'u8[8192]{0}', space=vmem, size = 0x2000, scoped, tag = 'input window, operand 0']
    #allocation3 [shape = 's32[2]{0}', space=sflag, size = 0x8, scoped, tag = 'scoped memory for tpu_custom_call.1']
    %8 = vsyncpa [#allocation3], 0
    %s9 = scalar_lea.sflag [#allocation3], 1
    %10 = vsyncpa %s9, 0
    loop: start=0, step=1, limit=4
    $region2: #{tpu_custom_call.1} parent=1 // loop_pre_header
      _
    $region3: #{tpu_custom_call.1} parent=1 // loop_header
      %s12 = sphi 0, %s16
      %p13 = scmp.ge.s32.totalorder %s12, 4
      %s19 = sphi 0, %s31
      %s20 = sphi 0, %s27
      %s21 = sphi 0, %s19
      %s22 = sphi 0, %s20
      %s23 = sphi 0, %s21
      %s24 = sphi 0, %s22
      %s36 = sphi 0, %s38
      %s39 = sphi 0, %s36
      %s40 = sphi 0, %s39
      %s56 = sphi 0, %s40
      %s62 = sphi 0, %s64
      %s65 = sphi 0, %s62
      %s66 = sphi 0, %s65
      %s82 = sphi 0, %s66
      %s88 = sphi 0, %s90
      %s91 = sphi 0, %s88
      %s92 = sphi 0, %s91
      %s108 = sphi 0, %s92
    $region4: #{tpu_custom_call.1} parent=1 // loop_header_branch
      %15 = sbr.rel (%p13) target = $region8
    $region5: #{tpu_custom_call.1} parent=1 // loop_body
      %s17 = ssub.s32 %s12, 1
      %s18 = ssub.s32 %s12, 2
      %s25 = sadd.s32 1, %s20
      %p26 = scmp.ge.s32.totalorder %s25, 1
      %s27 = scalar_select %p26, 0, %s25
      %s28 = sadd.s32 1, %s19
      %s29 = scalar_select %p26, %s28, %s19
      %p30 = scmp.ge.s32.totalorder %s29, 2
      %s31 = scalar_select %p30, 0, %s29
      %s32 = ssub.s32 %s19, %s31
      %s33 = ssub.s32 %s20, %s27
      %s34 = sor.u32 %s32, %s33
      %p35 = scmp.eq.s32.totalorder %s34, 0
      %s37 = sadd.s32 %s36, 1
      %s38 = scalar_select %p35, %s36, %s37
      %p41 = pneg %p35
      %p42 = scmp.eq.s32.totalorder %s12, 1
      %p43 = por %p41, %p42
      %p44 = scmp.ne.s32.totalorder %s36, %s39
      %p45 = scmp.eq.s32.totalorder %s12, 0
      %p46 = por %p44, %p45
      %p47 = scmp.ne.s32.totalorder %s36, %s39
      %p48 = scmp.eq.s32.totalorder %s17, 1
      %p49 = por %p47, %p48
      %p50 = scmp.ne.s32.totalorder %s39, %s40
      %p51 = scmp.eq.s32.totalorder %s17, 0
      %p52 = por %p50, %p51
      %p53 = scmp.ne.s32.totalorder %s39, %s40
      %p54 = scmp.eq.s32.totalorder %s18, 1
      %p55 = por %p53, %p54
      %p57 = scmp.ne.s32.totalorder %s40, %s56
      %p58 = scmp.eq.s32.totalorder %s18, 0
      %p59 = por %p57, %p58
      %s60 = ssub.s32 %s19, %s31
      %p61 = scmp.eq.s32.totalorder %s60, 0
      %s63 = sadd.s32 %s62, 1
      %s64 = scalar_select %p61, %s62, %s63
      %p67 = pneg %p61
      %p68 = scmp.eq.s32.totalorder %s12, 1
      %p69 = por %p67, %p68
      %p70 = scmp.ne.s32.totalorder %s62, %s65
      %p71 = scmp.eq.s32.totalorder %s12, 0
      %p72 = por %p70, %p71
      %p73 = scmp.ne.s32.totalorder %s62, %s65
      %p74 = scmp.eq.s32.totalorder %s17, 1
      %p75 = por %p73, %p74
      %p76 = scmp.ne.s32.totalorder %s65, %s66
      %p77 = scmp.eq.s32.totalorder %s17, 0
      %p78 = por %p76, %p77
      %p79 = scmp.ne.s32.totalorder %s65, %s66
      %p80 = scmp.eq.s32.totalorder %s18, 1
      %p81 = por %p79, %p80
      %p83 = scmp.ne.s32.totalorder %s66, %s82
      %p84 = scmp.eq.s32.totalorder %s18, 0
      %p85 = por %p83, %p84
      %s86 = ssub.s32 %s19, %s31
      %p87 = scmp.eq.s32.totalorder %s86, 0
      %s89 = sadd.s32 %s88, 1
      %s90 = scalar_select %p87, %s88, %s89
      %p93 = pneg %p87
      %p94 = scmp.eq.s32.totalorder %s12, 1
      %p95 = por %p93, %p94
      %p96 = scmp.ne.s32.totalorder %s88, %s91
      %p97 = scmp.eq.s32.totalorder %s12, 0
      %p98 = por %p96, %p97
      %p99 = scmp.ne.s32.totalorder %s88, %s91
      %p100 = scmp.eq.s32.totalorder %s17, 1
      %p101 = por %p99, %p100
      %p102 = scmp.ne.s32.totalorder %s91, %s92
      %p103 = scmp.eq.s32.totalorder %s17, 0
      %p104 = por %p102, %p103
      %p105 = scmp.ne.s32.totalorder %s91, %s92
      %p106 = scmp.eq.s32.totalorder %s18, 1
      %p107 = por %p105, %p106
      %p109 = scmp.ne.s32.totalorder %s92, %s108
      %p110 = scmp.eq.s32.totalorder %s18, 0
      %p111 = por %p109, %p110
      %p112 = scmp.le.s32.totalorder 1, %s12
      %p113 = scmp.lt.s32.totalorder %s12, 3
      %p114 = pnand %p112, %p113
      %p115 = pneg %p114
      // Predicated region
      $region9: #{tpu_custom_call.1} parent=5 // pred_check
        _
      $region10: #{tpu_custom_call.1} parent=5 // pred_check_branch
        %117 = sbr.rel (%p114) target = $region12
      $region11: #{tpu_custom_call.1} parent=5 // pred_region
        %s118 = ssub.s32 %s12, 1
      $region12: #{tpu_custom_call.1} parent=5 // pred_fallthru
        _
      %p119 = scmp.lt.s32.totalorder %s12, 2
      // Predicated region
      $region13: #{tpu_custom_call.1} parent=5 // pred_check
        %p120 = pneg %p119
      $region14: #{tpu_custom_call.1} parent=5 // pred_check_branch
        %122 = sbr.rel (%p120) target = $region16
      $region15: #{tpu_custom_call.1} parent=5 // pred_region
        // Predicated region
        $region17: #{tpu_custom_call.1} parent=15 // pred_check
          %p123 = pneg %p46
        $region18: #{tpu_custom_call.1} parent=15 // pred_check_branch
          %125 = sbr.rel (%p123) target = $region20
        $region19: #{tpu_custom_call.1} parent=15 // pred_region
          %s126 = sand.u32 %s36, 1
          %s127 = scalar_lea.sflag [#allocation3], %s126
          %s128 = sand.u32 %s36, 1
          %s129 = smul.addr %s128, 8
          %s130 = scalar_lea.vmem [#allocation2], %s129
          %s131 = smul.u32 2, %s20
          %s133 = ssub.s32 128, 128
          %134 = vsyncadd %s127, %s133
          %s135 = smul.addr %s19, 2
          %s136 = sadd.s32 %s131, %s135
          %s137 = smul.addr %s136, 64
          %s138 = scalar_lea.hbm %s0, %s137
          %s140 = sshll.u32 %s130, 4
          %s141 = int_to_ptr.vmem [resolvable:$true] %s140
          %143 = dma.hbm_to_vmem [thread:$0]  %s138, 128, %s141, %s127
        $region20: #{tpu_custom_call.1} parent=15 // pred_fallthru
          _
      $region16: #{tpu_custom_call.1} parent=5 // pred_fallthru
        _
      %p144 = scmp.le.s32.totalorder 1, %s12
      %p145 = scmp.lt.s32.totalorder %s12, 3
      %p146 = pnand %p144, %p145
      %p147 = pneg %p146
      // Predicated region
      $region21: #{tpu_custom_call.1} parent=5 // pred_check
        _
      $region22: #{tpu_custom_call.1} parent=5 // pred_check_branch
        %149 = sbr.rel (%p146) target = $region24
      $region23: #{tpu_custom_call.1} parent=5 // pred_region
        %s150 = ssub.s32 %s12, 1
        %s151 = sand.u32 %s39, 1
        %s152 = scalar_lea.sflag [#allocation3], %s151
        %s153 = sand.u32 %s39, 1
        %s154 = smul.addr %s153, 8
        %s155 = scalar_lea.vmem [#allocation2], %s154
        // Predicated region
        $region25: #{tpu_custom_call.1} parent=23 // pred_check
          %p156 = pneg %p52
        $region26: #{tpu_custom_call.1} parent=23 // pred_check_branch
          %158 = sbr.rel (%p156) target = $region28
        $region27: #{tpu_custom_call.1} parent=23 // pred_region
          %159 = dma.done %s152, 128
        $region28: #{tpu_custom_call.1} parent=23 // pred_fallthru
          _
        %s160 = sand.u32 %s39, 1
        %s161 = scalar_lea.sflag [#allocation3], %s160
        %s162 = sand.u32 %s39, 1
        %s163 = smul.addr %s162, 8
        %s164 = scalar_lea.vmem [#allocation2], %s163
        %p165 = pneg %p52
        %p166 = pneg %p49
        %p167 = pneg %p78
        %p168 = pneg %p75
        %p169 = scmp.lt.s32.totalorder %s21, 1
        %s170 = scalar_select %p169, %s21, 1
        %s171 = smul.addr %s170, 4
        %s172 = scalar_lea.vmem %s1, %s171
        %p173 = pneg %p104
        %p174 = pneg %p101
        %p175 = scmp.lt.s32.totalorder %s21, 1
        %s176 = scalar_select %p175, %s21, 1
        %s177 = smul.addr %s176, 4
        %s178 = scalar_lea.vmem %s2, %s177
        %s179 = smul.u32 2, %s22
        %p180 = scmp.lt.s32.totalorder %s21, 1
        %s181 = scalar_select %p180, %s21, 1
        %s182 = smul.addr %s181, 4
        %s183 = scalar_lea.vmem %s1, %s182
        %p184 = scmp.lt.s32.totalorder %s21, 1
        %s185 = scalar_select %p184, %s21, 1
        %s186 = smul.addr %s185, 4
        %s187 = scalar_lea.vmem %s2, %s186
        %p188 = scmp.eq.s32.totalorder %s22, 0
        // Predicated region
        $region29: #{tpu_custom_call.1} parent=23 // pred_check
          %p189 = pneg %p188
        $region30: #{tpu_custom_call.1} parent=23 // pred_check_branch
          %191 = sbr.rel (%p189) target = $region32
        $region31: #{tpu_custom_call.1} parent=23 // pred_region
          %vm192 = vcmask 3072
          %193 = vst.msk [vmem:[%s183] sm:$0xf] %vm192, 0.0
          %194 = vst.msk [vmem:[%s187] sm:$0xf] %vm192, 0.0
        $region32: #{tpu_custom_call.1} parent=23 // pred_fallthru
          _
        %v195 = vld [vmem:[%s155] sm:$0xff]
        %v196 = vld [vmem:[%s183] sm:$0xf]
        %v198 = vcombine.high %v195, %v195
        %vm200 = vcmask 1043456
        %v201 = vsel %vm200, %v195, 0.0
        %v202 = vsel %vm200, %v198, 0.0
        %v203 = vadd.f32 %v201, %v202
        %204 = vadd.xlane.f32.xlu0 %v203
        %v205 = vpop.xlane.xlu0 %204
        %v206 = vadd.f32 %v196, %v205
        %vm207 = vcmask 3072
        %208 = vst.msk [vmem:[%s183] sm:$0xf] %vm207, %v206
        %v209 = vld [vmem:[%s187] sm:$0xf]
        %v210 = vmul.f32 %v195, %v195
        %v212 = vcombine.high %v210, %v210
        %v214 = vsel %vm200, %v210, 0.0
        %v215 = vsel %vm200, %v212, 0.0
        %v216 = vadd.f32 %v214, %v215
        %217 = vadd.xlane.f32.xlu0 %v216
        %v218 = vpop.xlane.xlu0 %217
        %v219 = vadd.f32 %v209, %v218
        %220 = vst.msk [vmem:[%s187] sm:$0xf] %vm207, %v219
        %p221 = scmp.lt.s32.totalorder %s21, 1
        %s222 = scalar_select %p221, %s21, 1
        %s223 = smul.addr %s222, 4
        %s224 = scalar_lea.vmem %s1, %s223
        %p225 = scmp.lt.s32.totalorder %s21, 1
        %s226 = scalar_select %p225, %s21, 1
        %s227 = smul.addr %s226, 4
        %s228 = scalar_lea.vmem %s2, %s227
        // Predicated region
        $region33: #{tpu_custom_call.1} parent=23 // pred_check
          %p229 = pneg %p75
        $region34: #{tpu_custom_call.1} parent=23 // pred_check_branch
          %231 = sbr.rel (%p229) target = $region36
        $region35: #{tpu_custom_call.1} parent=23 // pred_region
          _
        $region36: #{tpu_custom_call.1} parent=23 // pred_fallthru
          _
        // Predicated region
        $region37: #{tpu_custom_call.1} parent=23 // pred_check
          %p232 = pneg %p101
        $region38: #{tpu_custom_call.1} parent=23 // pred_check_branch
          %234 = sbr.rel (%p232) target = $region40
        $region39: #{tpu_custom_call.1} parent=23 // pred_region
          _
        $region40: #{tpu_custom_call.1} parent=23 // pred_fallthru
          _
      $region24: #{tpu_custom_call.1} parent=5 // pred_fallthru
        _
      %p235 = scmp.le.s32.totalorder 2, %s12
      // Predicated region
      $region41: #{tpu_custom_call.1} parent=5 // pred_check
        %p236 = pneg %p235
      $region42: #{tpu_custom_call.1} parent=5 // pred_check_branch
        %238 = sbr.rel (%p236) target = $region44
      $region43: #{tpu_custom_call.1} parent=5 // pred_region
        %s239 = ssub.s32 %s12, 2
        // Predicated region
        $region45: #{tpu_custom_call.1} parent=43 // pred_check
          %p240 = pneg %p81
        $region46: #{tpu_custom_call.1} parent=43 // pred_check_branch
          %242 = sbr.rel (%p240) target = $region48
        $region47: #{tpu_custom_call.1} parent=43 // pred_region
          %p243 = scmp.lt.s32.totalorder %s23, 1
          %s244 = scalar_select %p243, %s23, 1
          %s245 = smul.addr %s244, 4
          %s246 = scalar_lea.vmem %s1, %s245
        $region48: #{tpu_custom_call.1} parent=43 // pred_fallthru
          _
        // Predicated region
        $region49: #{tpu_custom_call.1} parent=43 // pred_check
          %p247 = pneg %p107
        $region50: #{tpu_custom_call.1} parent=43 // pred_check_branch
          %249 = sbr.rel (%p247) target = $region52
        $region51: #{tpu_custom_call.1} parent=43 // pred_region
          %p250 = scmp.lt.s32.totalorder %s23, 1
          %s251 = scalar_select %p250, %s23, 1
          %s252 = smul.addr %s251, 4
          %s253 = scalar_lea.vmem %s2, %s252
        $region52: #{tpu_custom_call.1} parent=43 // pred_fallthru
          _
      $region44: #{tpu_custom_call.1} parent=5 // pred_fallthru
        _
    $region6: #{tpu_custom_call.1} parent=1 // loop_footer
      %s16 = sadd.s32 1, %s12
    $region7: #{tpu_custom_call.1} parent=1 // loop_footer_branch
      %11 = sbr.rel target = $region3
    $region8: #{tpu_custom_call.1} parent=1 // loop_exit
      _
    %254 = vsyncpa [#allocation3], 1
    %s255 = scalar_lea.sflag [#allocation3], 1
    %256 = vsyncpa %s255, 1

</llo_original>
